<compile_context>
chip_gen: v6e
topology: v6e:2x2x1
jax: 0.10.0
libtpu: 0.0.40
codegen_flags: <defaults>
</compile_context>

<pallas_src>
import jax
import jax.numpy as jnp
from jax.experimental import pallas as pl
from jax.experimental.pallas import tpu as pltpu


def _toy_kernel(w1_ref, x_ref, b_ref, o_ref):
    w = w1_ref[...]   # (IT, F, R)
    xi = x_ref[...]   # (IT, B, F)
    bi = b_ref[...]   # (IT, 1, F)

    # Down-project: h[g,b,r] = sum_f x[g,b,f] * w[g,f,r]
    h = jnp.einsum('gfr,gbf->gbr', w, xi,
                   preferred_element_type=jnp.float32)
    # Up-project (contract R directly; no w.T materialized):
    # out[g,b,f] = sum_r h[g,b,r] * w[g,f,r]
    out = jnp.einsum('gfr,gbr->gbf', w, h,
                     preferred_element_type=jnp.float32) + bi
    o_ref[...] = jnp.maximum(out, 0.0).astype(o_ref.dtype)


def anthropic_toy_forward(w1, b, x):
    """w1: (I, F, R), b: (I, F), x: (I, B, F) -> (I, B, F)."""
    I, F, R = w1.shape
    _, B, _ = x.shape
    b3 = b.reshape(I, 1, F)

    # Batch instances per grid step.  Keep >=2 grid points when I is even so
    # the "parallel" axis can be sharded across v7x's two TensorCores.
    n_steps = 2 if (I >= 2 and I % 2 == 0) else 1
    IT = I // n_steps

    return pl.pallas_call(
        _toy_kernel,
        out_shape=jax.ShapeDtypeStruct((I, B, F), x.dtype),
        grid_spec=pltpu.PrefetchScalarGridSpec(
            num_scalar_prefetch=0,
            grid=(n_steps,),
            in_specs=[
                pl.BlockSpec((IT, F, R), lambda i: (i, 0, 0)),
                pl.BlockSpec((IT, B, F), lambda i: (i, 0, 0)),
                pl.BlockSpec((IT, 1, F), lambda i: (i, 0, 0)),
            ],
            out_specs=pl.BlockSpec((IT, B, F), lambda i: (i, 0, 0)),
        ),
        compiler_params=pltpu.CompilerParams(
            dimension_semantics=("parallel",)),
    )(w1, x, b3)


def reference_forward(w1, b, x):
    h = jnp.einsum('ifr,ibf->ibr', w1, x)
    out = jnp.einsum('ifr,ibr->ibf', w1, h) + b[:, None, :]
    return jnp.maximum(out, 0.0)


if __name__ == "__main__":
    instances, features, representation, batch = 4, 32, 8, 8

    key = jax.random.PRNGKey(0)
    k_w, k_b, k_x = jax.random.split(key, 3)

    # Deterministic parameter init mirroring torch.randn(...) * 0.02
    w1 = jax.random.normal(k_w, (instances, features, representation),
                           dtype=jnp.float32) * 0.02
    b = jax.random.normal(k_b, (instances, features), dtype=jnp.float32) * 0.02
    x = jax.random.normal(k_x, (instances, batch, features), dtype=jnp.float32)

    out = anthropic_toy_forward(w1, b, x)
    out = jax.block_until_ready(out)

    ref = reference_forward(w1, b, x)
    assert out.shape == (instances, batch, features)
    assert jnp.allclose(out, ref, atol=1e-5, rtol=1e-5)

    print("KERNEL_OK")
</pallas_src>

<mosaic_0001>
module attributes {stable_mosaic.version = 11 : i64} {
  func.func @_toy_kernel(%arg0: i32, %arg1: memref<2x32x8xf32, #tpu.memory_space<vmem>>, %arg2: memref<2x8x32xf32, #tpu.memory_space<vmem>>, %arg3: memref<2x1x32xf32, #tpu.memory_space<vmem>>, %arg4: memref<2x8x32xf32, #tpu.memory_space<vmem>>) attributes {dimension_semantics = [#tpu.dimension_semantics<parallel>], iteration_bounds = array<i64: 2>, scalar_prefetch = 0 : i64, scratch_operands = 0 : i64, tpu.core_type = #tpu.core_type<tc>, window_params = [{transform_indices = @transform_0, window_bounds = array<i64: 2, 32, 8>}, {transform_indices = @transform_1, window_bounds = array<i64: 2, 8, 32>}, {transform_indices = @transform_2, window_bounds = array<i64: 2, 1, 32>}, {transform_indices = @transform_3, window_bounds = array<i64: 2, 8, 32>}]} {
    %c0 = arith.constant 0 : index
    %c0_0 = arith.constant 0 : index
    %c0_1 = arith.constant 0 : index
    %0 = vector.load %arg1[%c0, %c0_0, %c0_1] : memref<2x32x8xf32, #tpu.memory_space<vmem>>, vector<2x32x8xf32>
    %c0_2 = arith.constant 0 : index
    %c0_3 = arith.constant 0 : index
    %c0_4 = arith.constant 0 : index
    %1 = vector.load %arg2[%c0_2, %c0_3, %c0_4] : memref<2x8x32xf32, #tpu.memory_space<vmem>>, vector<2x8x32xf32>
    %c0_5 = arith.constant 0 : index
    %c0_6 = arith.constant 0 : index
    %c0_7 = arith.constant 0 : index
    %2 = vector.load %arg3[%c0_5, %c0_6, %c0_7] : memref<2x1x32xf32, #tpu.memory_space<vmem>>, vector<2x1x32xf32>
    "tpu.trace_start"() <{level = 10 : i32, message = "gfr,gbf->gbr"}> : () -> ()
    %cst = arith.constant dense<0.000000e+00> : vector<2x8x8xf32>
    %3 = tpu.matmul %1, %0, %cst {dimension_numbers = #tpu.dot_dimension_numbers<[2], [1], [1], [2], [0, 0, 0, 1, 1, 2], [0], [0]>} : vector<2x8x32xf32>, vector<2x32x8xf32>, vector<2x8x8xf32> -> vector<2x8x8xf32>
    "tpu.trace_stop"() : () -> ()
    "tpu.trace_start"() <{level = 10 : i32, message = "gfr,gbr->gbf"}> : () -> ()
    %cst_8 = arith.constant dense<0.000000e+00> : vector<2x8x32xf32>
    %4 = tpu.matmul %3, %0, %cst_8 {dimension_numbers = #tpu.dot_dimension_numbers<[2], [2], [1], [1], [0, 0, 0, 1, 1, 1], [0], [0]>} : vector<2x8x8xf32>, vector<2x32x8xf32>, vector<2x8x32xf32> -> vector<2x8x32xf32>
    "tpu.trace_stop"() : () -> ()
    %5 = vector.broadcast %2 : vector<2x1x32xf32> to vector<2x8x32xf32>
    %6 = arith.addf %4, %5 : vector<2x8x32xf32>
    %cst_9 = arith.constant 0.000000e+00 : f32
    %7 = vector.broadcast %cst_9 : f32 to vector<2x8x32xf32>
    %8 = arith.maximumf %6, %7 : vector<2x8x32xf32>
    %c0_10 = arith.constant 0 : index
    %c0_11 = arith.constant 0 : index
    %c0_12 = arith.constant 0 : index
    %9 = vector.load %arg4[%c0_10, %c0_11, %c0_12] : memref<2x8x32xf32, #tpu.memory_space<vmem>>, vector<2x8x32xf32>
    tpu.vector_store %arg4[%c0_10, %c0_11, %c0_12], %8 {strides = array<i32>} : memref<2x8x32xf32, #tpu.memory_space<vmem>>, vector<2x8x32xf32>,
    return
  }
  func.func @transform_0(%arg0: i32) -> (i32, i32, i32) {
    %c0_i32 = arith.constant 0 : i32
    %c0_i32_0 = arith.constant 0 : i32
    %c0_i32_1 = arith.constant 0 : i32
    return %arg0, %c0_i32, %c0_i32_0 : i32, i32, i32
  }
  func.func @transform_1(%arg0: i32) -> (i32, i32, i32) {
    %c0_i32 = arith.constant 0 : i32
    %c0_i32_0 = arith.constant 0 : i32
    %c0_i32_1 = arith.constant 0 : i32
    return %arg0, %c0_i32, %c0_i32_0 : i32, i32, i32
  }
  func.func @transform_2(%arg0: i32) -> (i32, i32, i32) {
    %c0_i32 = arith.constant 0 : i32
    %c0_i32_0 = arith.constant 0 : i32
    %c0_i32_1 = arith.constant 0 : i32
    return %arg0, %c0_i32, %c0_i32_0 : i32, i32, i32
  }
  func.func @transform_3(%arg0: i32) -> (i32, i32, i32) {
    %c0_i32 = arith.constant 0 : i32
    %c0_i32_0 = arith.constant 0 : i32
    %c0_i32_1 = arith.constant 0 : i32
    return %arg0, %c0_i32, %c0_i32_0 : i32, i32, i32
  }
}

</mosaic_0001>

<llo_original>
// kernel: tpu_custom_call.1
$region0: #{tpu_custom_call.1}
  #allocation0 [shape = 'u32[]', space=smem, size = 0x4, offset = 0x4, fixed_abs, tag = 'smem constant byte address 0x4 - core index']
  #allocation1 [shape = 'u32[144,128]{1,0:T(1,128)}', space=vmem, size = 0x12000, scoped, tag = 'internal scratch']
  %s0 = inlined_call_operand.vmem [shape: f32[4,32,8], index: 0, kind: input, shape index: {}]
  %s1 = inlined_call_operand.vmem [shape: f32[4,8,32], index: 1, kind: input, shape index: {}]
  %s2 = inlined_call_operand.vmem [shape: f32[4,1,32], index: 2, kind: input, shape index: {}]
  %s3 = inlined_call_operand.hbm [shape: f32[4,8,32], index: 3, kind: output, shape index: {}]
  %s4 = sld [smem:[#allocation0]]
  $region45: #{tpu_custom_call.1} parent=0
    _
  %s6 = ssub.s32 1, %s4
  %s7 = scalar_select 0, %s6, %s4
  $region1: #{tpu_custom_call.1} parent=0
    #allocation2 [shape = 'u8[16384]{0}', space=vmem, size = 0x4000, scoped, tag = 'output window, operand 0']
    #allocation3 [shape = 's32[2]{0}', space=sflag, size = 0x8, scoped, tag = 'scoped memory for tpu_custom_call.1']
    %8 = vsyncpa [#allocation3], 0
    %s9 = scalar_lea.sflag [#allocation3], 1
    %10 = vsyncpa %s9, 0
    loop: start=0, step=1, limit=4
    $region2: #{tpu_custom_call.1} parent=1 // loop_pre_header
      _
    $region3: #{tpu_custom_call.1} parent=1 // loop_header
      %s12 = sphi 0, %s16
      %p13 = scmp.ge.s32.totalorder %s12, 4
      %s22 = sphi 0, %s24
      %s25 = sphi 0, %s22
      %s26 = sphi 0, %s25
      %s42 = sphi 0, %s26
      %s48 = sphi 0, %s50
      %s51 = sphi 0, %s48
      %s52 = sphi 0, %s51
      %s68 = sphi 0, %s52
      %s74 = sphi 0, %s76
      %s77 = sphi 0, %s74
      %s78 = sphi 0, %s77
      %s94 = sphi 0, %s78
      %s100 = sphi 0, %s102
      %s103 = sphi 0, %s100
      %s104 = sphi 0, %s103
      %s120 = sphi 0, %s104
    $region4: #{tpu_custom_call.1} parent=1 // loop_header_branch
      %15 = sbr.rel (%p13) target = $region8
    $region5: #{tpu_custom_call.1} parent=1 // loop_body
      %s17 = ssub.s32 %s12, 1
      %s18 = ssub.s32 %s12, 2
      %s19 = sadd.s32 %s12, 1
      %s20 = ssub.s32 %s12, %s19
      %p21 = scmp.eq.s32.totalorder %s20, 0
      %s23 = sadd.s32 %s22, 1
      %s24 = scalar_select %p21, %s22, %s23
      %p27 = pneg %p21
      %p28 = scmp.eq.s32.totalorder %s12, 1
      %p29 = por %p27, %p28
      %p30 = scmp.ne.s32.totalorder %s22, %s25
      %p31 = scmp.eq.s32.totalorder %s12, 0
      %p32 = por %p30, %p31
      %p33 = scmp.ne.s32.totalorder %s22, %s25
      %p34 = scmp.eq.s32.totalorder %s17, 1
      %p35 = por %p33, %p34
      %p36 = scmp.ne.s32.totalorder %s25, %s26
      %p37 = scmp.eq.s32.totalorder %s17, 0
      %p38 = por %p36, %p37
      %p39 = scmp.ne.s32.totalorder %s25, %s26
      %p40 = scmp.eq.s32.totalorder %s18, 1
      %p41 = por %p39, %p40
      %p43 = scmp.ne.s32.totalorder %s26, %s42
      %p44 = scmp.eq.s32.totalorder %s18, 0
      %p45 = por %p43, %p44
      %s46 = ssub.s32 %s12, %s19
      %p47 = scmp.eq.s32.totalorder %s46, 0
      %s49 = sadd.s32 %s48, 1
      %s50 = scalar_select %p47, %s48, %s49
      %p53 = pneg %p47
      %p54 = scmp.eq.s32.totalorder %s12, 1
      %p55 = por %p53, %p54
      %p56 = scmp.ne.s32.totalorder %s48, %s51
      %p57 = scmp.eq.s32.totalorder %s12, 0
      %p58 = por %p56, %p57
      %p59 = scmp.ne.s32.totalorder %s48, %s51
      %p60 = scmp.eq.s32.totalorder %s17, 1
      %p61 = por %p59, %p60
      %p62 = scmp.ne.s32.totalorder %s51, %s52
      %p63 = scmp.eq.s32.totalorder %s17, 0
      %p64 = por %p62, %p63
      %p65 = scmp.ne.s32.totalorder %s51, %s52
      %p66 = scmp.eq.s32.totalorder %s18, 1
      %p67 = por %p65, %p66
      %p69 = scmp.ne.s32.totalorder %s52, %s68
      %p70 = scmp.eq.s32.totalorder %s18, 0
      %p71 = por %p69, %p70
      %s72 = ssub.s32 %s12, %s19
      %p73 = scmp.eq.s32.totalorder %s72, 0
      %s75 = sadd.s32 %s74, 1
      %s76 = scalar_select %p73, %s74, %s75
      %p79 = pneg %p73
      %p80 = scmp.eq.s32.totalorder %s12, 1
      %p81 = por %p79, %p80
      %p82 = scmp.ne.s32.totalorder %s74, %s77
      %p83 = scmp.eq.s32.totalorder %s12, 0
      %p84 = por %p82, %p83
      %p85 = scmp.ne.s32.totalorder %s74, %s77
      %p86 = scmp.eq.s32.totalorder %s17, 1
      %p87 = por %p85, %p86
      %p88 = scmp.ne.s32.totalorder %s77, %s78
      %p89 = scmp.eq.s32.totalorder %s17, 0
      %p90 = por %p88, %p89
      %p91 = scmp.ne.s32.totalorder %s77, %s78
      %p92 = scmp.eq.s32.totalorder %s18, 1
      %p93 = por %p91, %p92
      %p95 = scmp.ne.s32.totalorder %s78, %s94
      %p96 = scmp.eq.s32.totalorder %s18, 0
      %p97 = por %p95, %p96
      %s98 = ssub.s32 %s12, %s19
      %p99 = scmp.eq.s32.totalorder %s98, 0
      %s101 = sadd.s32 %s100, 1
      %s102 = scalar_select %p99, %s100, %s101
      %p105 = pneg %p99
      %p106 = scmp.eq.s32.totalorder %s12, 1
      %p107 = por %p105, %p106
      %p108 = scmp.ne.s32.totalorder %s100, %s103
      %p109 = scmp.eq.s32.totalorder %s12, 0
      %p110 = por %p108, %p109
      %p111 = scmp.ne.s32.totalorder %s100, %s103
      %p112 = scmp.eq.s32.totalorder %s17, 1
      %p113 = por %p111, %p112
      %p114 = scmp.ne.s32.totalorder %s103, %s104
      %p115 = scmp.eq.s32.totalorder %s17, 0
      %p116 = por %p114, %p115
      %p117 = scmp.ne.s32.totalorder %s103, %s104
      %p118 = scmp.eq.s32.totalorder %s18, 1
      %p119 = por %p117, %p118
      %p121 = scmp.ne.s32.totalorder %s104, %s120
      %p122 = scmp.eq.s32.totalorder %s18, 0
      %p123 = por %p121, %p122
      %p124 = scmp.le.s32.totalorder 1, %s12
      %p125 = scmp.lt.s32.totalorder %s12, 3
      %p126 = pnand %p124, %p125
      %p127 = pneg %p126
      // Predicated region
      $region9: #{tpu_custom_call.1} parent=5 // pred_check
        _
      $region10: #{tpu_custom_call.1} parent=5 // pred_check_branch
        %129 = sbr.rel (%p126) target = $region12
      $region11: #{tpu_custom_call.1} parent=5 // pred_region
        %s130 = ssub.s32 %s12, 1
      $region12: #{tpu_custom_call.1} parent=5 // pred_fallthru
        _
      %p131 = scmp.lt.s32.totalorder %s12, 2
      // Predicated region
      $region13: #{tpu_custom_call.1} parent=5 // pred_check
        %p132 = pneg %p131
      $region14: #{tpu_custom_call.1} parent=5 // pred_check_branch
        %134 = sbr.rel (%p132) target = $region16
      $region15: #{tpu_custom_call.1} parent=5 // pred_region
        // Predicated region
        $region17: #{tpu_custom_call.1} parent=15 // pred_check
          %p135 = pneg %p32
        $region18: #{tpu_custom_call.1} parent=15 // pred_check_branch
          %137 = sbr.rel (%p135) target = $region20
        $region19: #{tpu_custom_call.1} parent=15 // pred_region
          %s138 = smul.u32 2, %s12
          %p139 = scmp.lt.s32.totalorder %s138, 3
          %s140 = scalar_select %p139, %s138, 3
          %s141 = smul.addr %s140, 4
          %s142 = smul.addr %s141, 8
          %s143 = scalar_lea.vmem %s0, %s142
          %s144 = smul.u32 2, %s12
        $region20: #{tpu_custom_call.1} parent=15 // pred_fallthru
          _
        // Predicated region
        $region21: #{tpu_custom_call.1} parent=15 // pred_check
          %p145 = pneg %p58
        $region22: #{tpu_custom_call.1} parent=15 // pred_check_branch
          %147 = sbr.rel (%p145) target = $region24
        $region23: #{tpu_custom_call.1} parent=15 // pred_region
          %s148 = smul.u32 2, %s12
          %p149 = scmp.lt.s32.totalorder %s148, 3
          %s150 = scalar_select %p149, %s148, 3
          %s151 = smul.addr %s150, 8
          %s152 = scalar_lea.vmem %s1, %s151
          %s153 = smul.u32 2, %s12
        $region24: #{tpu_custom_call.1} parent=15 // pred_fallthru
          _
        // Predicated region
        $region25: #{tpu_custom_call.1} parent=15 // pred_check
          %p154 = pneg %p84
        $region26: #{tpu_custom_call.1} parent=15 // pred_check_branch
          %156 = sbr.rel (%p154) target = $region28
        $region27: #{tpu_custom_call.1} parent=15 // pred_region
          %s157 = smul.u32 2, %s12
          %p158 = scmp.lt.s32.totalorder %s157, 3
          %s159 = scalar_select %p158, %s157, 3
          %s160 = scalar_lea.vmem %s2, %s159
          %s161 = smul.u32 2, %s12
        $region28: #{tpu_custom_call.1} parent=15 // pred_fallthru
          _
      $region16: #{tpu_custom_call.1} parent=5 // pred_fallthru
        _
      %p162 = scmp.le.s32.totalorder 1, %s12
      %p163 = scmp.lt.s32.totalorder %s12, 3
      %p164 = pnand %p162, %p163
      %p165 = pneg %p164
      // Predicated region
      $region29: #{tpu_custom_call.1} parent=5 // pred_check
        _
      $region30: #{tpu_custom_call.1} parent=5 // pred_check_branch
        %167 = sbr.rel (%p164) target = $region32
      $region31: #{tpu_custom_call.1} parent=5 // pred_region
        %s168 = ssub.s32 %s12, 1
        %s169 = smul.u32 2, %s17
        %p170 = scmp.lt.s32.totalorder %s169, 3
        %s171 = scalar_select %p170, %s169, 3
        %s172 = smul.addr %s171, 4
        %s173 = smul.addr %s172, 8
        %s174 = scalar_lea.vmem %s0, %s173
        %p175 = pneg %p38
        %p176 = pneg %p35
        %s177 = smul.u32 2, %s17
        %p178 = scmp.lt.s32.totalorder %s177, 3
        %s179 = scalar_select %p178, %s177, 3
        %s180 = smul.addr %s179, 8
        %s181 = scalar_lea.vmem %s1, %s180
        %p182 = pneg %p64
        %p183 = pneg %p61
        %s184 = smul.u32 2, %s17
        %p185 = scmp.lt.s32.totalorder %s184, 3
        %s186 = scalar_select %p185, %s184, 3
        %s187 = scalar_lea.vmem %s2, %s186
        %p188 = pneg %p90
        %p189 = pneg %p87
        %p190 = pneg %p116
        %p191 = pneg %p113
        %s192 = sand.u32 %s103, 1
        %s193 = scalar_lea.sflag [#allocation3], %s192
        %s194 = sand.u32 %s103, 1
        %s195 = smul.addr %s194, 16
        %s196 = scalar_lea.vmem [#allocation2], %s195
        %s197 = smul.u32 2, %s17
        %p198 = scmp.lt.s32.totalorder %s197, 3
        %s199 = scalar_select %p198, %s197, 3
        %s200 = smul.addr %s199, 4
        %s201 = smul.addr %s200, 8
        %s202 = scalar_lea.vmem %s0, %s201
        %s203 = smul.u32 2, %s17
        %s204 = smul.u32 2, %s17
        %p205 = scmp.lt.s32.totalorder %s204, 3
        %s206 = scalar_select %p205, %s204, 3
        %s207 = smul.addr %s206, 8
        %s208 = scalar_lea.vmem %s1, %s207
        %s209 = smul.u32 2, %s17
        %s210 = smul.u32 2, %s17
        %p211 = scmp.lt.s32.totalorder %s210, 3
        %s212 = scalar_select %p211, %s210, 3
        %s213 = scalar_lea.vmem %s2, %s212
        %s214 = smul.u32 2, %s17
        %s215 = smul.u32 2, %s17
        %v216 = vld [vmem:[%s202] sm:$0xff]
        %v217 = vld [vmem:[%s202 + $0x8] sm:$0xff]
        %v218 = vld [vmem:[%s202 + $0x10] sm:$0xff]
        %v219 = vld [vmem:[%s202 + $0x18] sm:$0xff]
        %v220 = vld [vmem:[%s202 + $0x20] sm:$0xff]
        %v221 = vld [vmem:[%s202 + $0x28] sm:$0xff]
        %v222 = vld [vmem:[%s202 + $0x30] sm:$0xff]
        %v223 = vld [vmem:[%s202 + $0x38] sm:$0xff]
        %v224 = vld [vmem:[%s208] sm:$0xff]
        %v225 = vld [vmem:[%s208 + $0x8] sm:$0xff]
        %v226 = vld [vmem:[%s213] sm:$0x1]
        %v227 = vld [vmem:[%s213 + $0x1] sm:$0x1]
        %vm228 = vcmask 261120
        %v230 = vsel %vm228, %v224, 0
        %232 = vmatprep.subr.mxu0 0.0
        %233 = vmatpush1.msra.mxu0 0.0
        %234 = vmatprep.subr.mxu0 0.0
        %235 = vmatpush1.msra.mxu0 0.0
        %236 = vmatprep.subr.mxu0 0.0
        %237 = vmatpush1.msra.mxu0 0.0
        %238 = vmatprep.subr.mxu0 0.0
        %239 = vmatpush1.msra.mxu0 0.0
        %240 = vmatprep.subr.mxu0 0.0
        %241 = vmatpush1.msra.mxu0 0.0
        %242 = vmatprep.subr.mxu0 0.0
        %243 = vmatpush1.msra.mxu0 0.0
        %244 = vmatprep.subr.mxu0 0.0
        %245 = vmatpush1.msra.mxu0 0.0
        %246 = vmatprep.subr.mxu0 0.0
        %247 = vmatpush1.msra.mxu0 0.0
        %248 = vmatprep.subr.mxu0 0.0
        %249 = vmatpush1.msra.mxu0 0.0
        %250 = vmatprep.subr.mxu0 0.0
        %251 = vmatpush1.msra.mxu0 0.0
        %252 = vmatprep.subr.mxu0 0.0
        %253 = vmatpush1.msra.mxu0 0.0
        %254 = vmatprep.subr.mxu0 0.0
        %255 = vmatpush1.msra.mxu0 0.0
        %256 = vmatprep.subr.mxu0 0.0
        %257 = vmatpush1.msra.mxu0 %v219
        %258 = vmatprep.subr.mxu0 0.0
        %259 = vmatpush1.msra.mxu0 %v218
        %260 = vmatprep.subr.mxu0 0.0
        %261 = vmatpush1.msra.mxu0 %v217
        %262 = vmatprep.subr.mxu0 0.0
        %263 = vmatpush1.msra.mxu0 %v216
        %264 = vmatprep.subr.mxu0 0.0
        %265 = vmatpush2.msra.mxu0 0.0
        %266 = vmatprep.subr.mxu0 0.0
        %267 = vmatpush2.msra.mxu0 0.0
        %268 = vmatprep.subr.mxu0 0.0
        %269 = vmatpush2.msra.mxu0 0.0
        %270 = vmatprep.subr.mxu0 0.0
        %271 = vmatpush2.msra.mxu0 0.0
        %272 = vmatprep.subr.mxu0 0.0
        %273 = vmatpush2.msra.mxu0 0.0
        %274 = vmatprep.subr.mxu0 0.0
        %275 = vmatpush2.msra.mxu0 0.0
        %276 = vmatprep.subr.mxu0 0.0
        %277 = vmatpush2.msra.mxu0 0.0
        %278 = vmatprep.subr.mxu0 0.0
        %279 = vmatpush2.msra.mxu0 0.0
        %280 = vmatprep.subr.mxu0 0.0
        %281 = vmatpush2.msra.mxu0 0.0
        %282 = vmatprep.subr.mxu0 0.0
        %283 = vmatpush2.msra.mxu0 0.0
        %284 = vmatprep.subr.mxu0 0.0
        %285 = vmatpush2.msra.mxu0 0.0
        %286 = vmatprep.subr.mxu0 0.0
        %287 = vmatpush2.msra.mxu0 0.0
        %288 = vmatprep.subr.mxu0 0.0
        %289 = vmatpush2.msra.mxu0 0.0
        %290 = vmatprep.subr.mxu0 0.0
        %291 = vmatpush2.msra.mxu0 0.0
        %292 = vmatprep.subr.mxu0 0.0
        %293 = vmatpush2.msra.mxu0 0.0
        %294 = vmatprep.subr.mxu0 0.0
        %295 = vmatpush2.msra.mxu0 0.0
        %296 = vmatprep.mubr.f32.mxu0 0.0
        %297 = vmatmul.mubr.f32.gmra.mxu0 %v230
        %v298 = vpop.f32.mrf.mxu0
        %v299 = vadd.f32 0.0, %v298
        %v300 = vpop.f32.mrf.mxu0
        %301 = vdwg.mxu0
        %v303 = vsel %vm228, %v225, 0
        %305 = vmatprep.subr.mxu0 0.0
        %306 = vmatpush1.msra.mxu0 0.0
        %307 = vmatprep.subr.mxu0 0.0
        %308 = vmatpush1.msra.mxu0 0.0
        %309 = vmatprep.subr.mxu0 0.0
        %310 = vmatpush1.msra.mxu0 0.0
        %311 = vmatprep.subr.mxu0 0.0
        %312 = vmatpush1.msra.mxu0 0.0
        %313 = vmatprep.subr.mxu0 0.0
        %314 = vmatpush1.msra.mxu0 0.0
        %315 = vmatprep.subr.mxu0 0.0
        %316 = vmatpush1.msra.mxu0 0.0
        %317 = vmatprep.subr.mxu0 0.0
        %318 = vmatpush1.msra.mxu0 0.0
        %319 = vmatprep.subr.mxu0 0.0
        %320 = vmatpush1.msra.mxu0 0.0
        %321 = vmatprep.subr.mxu0 0.0
        %322 = vmatpush1.msra.mxu0 0.0
        %323 = vmatprep.subr.mxu0 0.0
        %324 = vmatpush1.msra.mxu0 0.0
        %325 = vmatprep.subr.mxu0 0.0
        %326 = vmatpush1.msra.mxu0 0.0
        %327 = vmatprep.subr.mxu0 0.0
        %328 = vmatpush1.msra.mxu0 0.0
        %329 = vmatprep.subr.mxu0 0.0
        %330 = vmatpush1.msra.mxu0 %v223
        %331 = vmatprep.subr.mxu0 0.0
        %332 = vmatpush1.msra.mxu0 %v222
        %333 = vmatprep.subr.mxu0 0.0
        %334 = vmatpush1.msra.mxu0 %v221
        %335 = vmatprep.subr.mxu0 0.0
        %336 = vmatpush1.msra.mxu0 %v220
        %337 = vmatprep.subr.mxu0 0.0
        %338 = vmatpush2.msra.mxu0 0.0
        %339 = vmatprep.subr.mxu0 0.0
        %340 = vmatpush2.msra.mxu0 0.0
        %341 = vmatprep.subr.mxu0 0.0
        %342 = vmatpush2.msra.mxu0 0.0
        %343 = vmatprep.subr.mxu0 0.0
        %344 = vmatpush2.msra.mxu0 0.0
        %345 = vmatprep.subr.mxu0 0.0
        %346 = vmatpush2.msra.mxu0 0.0
        %347 = vmatprep.subr.mxu0 0.0
        %348 = vmatpush2.msra.mxu0 0.0
        %349 = vmatprep.subr.mxu0 0.0
        %350 = vmatpush2.msra.mxu0 0.0
        %351 = vmatprep.subr.mxu0 0.0
        %352 = vmatpush2.msra.mxu0 0.0
        %353 = vmatprep.subr.mxu0 0.0
        %354 = vmatpush2.msra.mxu0 0.0
        %355 = vmatprep.subr.mxu0 0.0
        %356 = vmatpush2.msra.mxu0 0.0
        %357 = vmatprep.subr.mxu0 0.0
        %358 = vmatpush2.msra.mxu0 0.0
        %359 = vmatprep.subr.mxu0 0.0
        %360 = vmatpush2.msra.mxu0 0.0
        %361 = vmatprep.subr.mxu0 0.0
        %362 = vmatpush2.msra.mxu0 0.0
        %363 = vmatprep.subr.mxu0 0.0
        %364 = vmatpush2.msra.mxu0 0.0
        %365 = vmatprep.subr.mxu0 0.0
        %366 = vmatpush2.msra.mxu0 0.0
        %367 = vmatprep.subr.mxu0 0.0
        %368 = vmatpush2.msra.mxu0 0.0
        %369 = vmatprep.mubr.f32.mxu0 0.0
        %370 = vmatmul.mubr.f32.gmra.mxu0 %v303
        %v371 = vpop.f32.mrf.mxu0
        %v372 = vadd.f32 0.0, %v371
        %v373 = vpop.f32.mrf.mxu0
        %374 = vdwg.mxu0
        %v377 = vlaneseq
        %v378 = vshrl.u32 %v377, 7
        %v379 = vsub.s32 0, %v378
        %v380 = vrot.slane %v226, %v379
        %v381 = vlaneseq
        %v382 = vshrl.u32 %v381, 7
        %v383 = vsub.s32 0, %v382
        %v384 = vrot.slane %v227, %v383
        %vm387 = vcmask 64512
        %v389 = vsel %vm387, %v299, 0
        %v392 = vsel %vm387, %v216, 0
        %v395 = vsel %vm387, %v217, 0
        %v398 = vsel %vm387, %v218, 0
        %v401 = vsel %vm387, %v219, 0
        %403 = vmatprep.subr.mxu0 0.0
        %404 = vmatpush1.xpose.msra.mxu0 0.0
        %405 = vmatprep.subr.mxu0 0.0
        %406 = vmatpush1.xpose.msra.mxu0 0.0
        %407 = vmatprep.subr.mxu0 0.0
        %408 = vmatpush1.xpose.msra.mxu0 0.0
        %409 = vmatprep.subr.mxu0 0.0
        %410 = vmatpush1.xpose.msra.mxu0 0.0
        %411 = vmatprep.subr.mxu0 0.0
        %412 = vmatpush1.xpose.msra.mxu0 0.0
        %413 = vmatprep.subr.mxu0 0.0
        %414 = vmatpush1.xpose.msra.mxu0 0.0
        %415 = vmatprep.subr.mxu0 0.0
        %416 = vmatpush1.xpose.msra.mxu0 0.0
        %417 = vmatprep.subr.mxu0 0.0
        %418 = vmatpush1.xpose.msra.mxu0 0.0
        %419 = vmatprep.subr.mxu0 0.0
        %420 = vmatpush1.xpose.msra.mxu0 0.0
        %421 = vmatprep.subr.mxu0 0.0
        %422 = vmatpush1.xpose.msra.mxu0 0.0
        %423 = vmatprep.subr.mxu0 0.0
        %424 = vmatpush1.xpose.msra.mxu0 0.0
        %425 = vmatprep.subr.mxu0 0.0
        %426 = vmatpush1.xpose.msra.mxu0 0.0
        %427 = vmatprep.subr.mxu0 0.0
        %428 = vmatpush1.xpose.msra.mxu0 %v401
        %429 = vmatprep.subr.mxu0 0.0
        %430 = vmatpush1.xpose.msra.mxu0 %v398
        %431 = vmatprep.subr.mxu0 0.0
        %432 = vmatpush1.xpose.msra.mxu0 %v395
        %433 = vmatprep.subr.mxu0 0.0
        %434 = vmatpush1.xpose.msra.mxu0 %v392
        %435 = vmatprep.subr.mxu0 0.0
        %436 = vmatpush2.xpose.msra.mxu0 0.0
        %437 = vmatprep.subr.mxu0 0.0
        %438 = vmatpush2.xpose.msra.mxu0 0.0
        %439 = vmatprep.subr.mxu0 0.0
        %440 = vmatpush2.xpose.msra.mxu0 0.0
        %441 = vmatprep.subr.mxu0 0.0
        %442 = vmatpush2.xpose.msra.mxu0 0.0
        %443 = vmatprep.subr.mxu0 0.0
        %444 = vmatpush2.xpose.msra.mxu0 0.0
        %445 = vmatprep.subr.mxu0 0.0
        %446 = vmatpush2.xpose.msra.mxu0 0.0
        %447 = vmatprep.subr.mxu0 0.0
        %448 = vmatpush2.xpose.msra.mxu0 0.0
        %449 = vmatprep.subr.mxu0 0.0
        %450 = vmatpush2.xpose.msra.mxu0 0.0
        %451 = vmatprep.subr.mxu0 0.0
        %452 = vmatpush2.xpose.msra.mxu0 0.0
        %453 = vmatprep.subr.mxu0 0.0
        %454 = vmatpush2.xpose.msra.mxu0 0.0
        %455 = vmatprep.subr.mxu0 0.0
        %456 = vmatpush2.xpose.msra.mxu0 0.0
        %457 = vmatprep.subr.mxu0 0.0
        %458 = vmatpush2.xpose.msra.mxu0 0.0
        %459 = vmatprep.subr.mxu0 0.0
        %460 = vmatpush2.xpose.msra.mxu0 0.0
        %461 = vmatprep.subr.mxu0 0.0
        %462 = vmatpush2.xpose.msra.mxu0 0.0
        %463 = vmatprep.subr.mxu0 0.0
        %464 = vmatpush2.xpose.msra.mxu0 0.0
        %465 = vmatprep.subr.mxu0 0.0
        %466 = vmatpush2.xpose.msra.mxu0 0.0
        %467 = vmatprep.mubr.f32.mxu0 0.0
        %468 = vmatmul.mubr.f32.gmra.mxu0 %v389
        %v469 = vpop.f32.mrf.mxu0
        %v470 = vadd.f32 %v380, %v469
        %v471 = vpop.f32.mrf.mxu0
        %472 = vdwg.mxu0
        %v474 = vsel %vm387, %v372, 0
        %v477 = vsel %vm387, %v220, 0
        %v480 = vsel %vm387, %v221, 0
        %v483 = vsel %vm387, %v222, 0
        %v486 = vsel %vm387, %v223, 0
        %488 = vmatprep.subr.mxu0 0.0
        %489 = vmatpush1.xpose.msra.mxu0 0.0
        %490 = vmatprep.subr.mxu0 0.0
        %491 = vmatpush1.xpose.msra.mxu0 0.0
        %492 = vmatprep.subr.mxu0 0.0
        %493 = vmatpush1.xpose.msra.mxu0 0.0
        %494 = vmatprep.subr.mxu0 0.0
        %495 = vmatpush1.xpose.msra.mxu0 0.0
        %496 = vmatprep.subr.mxu0 0.0
        %497 = vmatpush1.xpose.msra.mxu0 0.0
        %498 = vmatprep.subr.mxu0 0.0
        %499 = vmatpush1.xpose.msra.mxu0 0.0
        %500 = vmatprep.subr.mxu0 0.0
        %501 = vmatpush1.xpose.msra.mxu0 0.0
        %502 = vmatprep.subr.mxu0 0.0
        %503 = vmatpush1.xpose.msra.mxu0 0.0
        %504 = vmatprep.subr.mxu0 0.0
        %505 = vmatpush1.xpose.msra.mxu0 0.0
        %506 = vmatprep.subr.mxu0 0.0
        %507 = vmatpush1.xpose.msra.mxu0 0.0
        %508 = vmatprep.subr.mxu0 0.0
        %509 = vmatpush1.xpose.msra.mxu0 0.0
        %510 = vmatprep.subr.mxu0 0.0
        %511 = vmatpush1.xpose.msra.mxu0 0.0
        %512 = vmatprep.subr.mxu0 0.0
        %513 = vmatpush1.xpose.msra.mxu0 %v486
        %514 = vmatprep.subr.mxu0 0.0
        %515 = vmatpush1.xpose.msra.mxu0 %v483
        %516 = vmatprep.subr.mxu0 0.0
        %517 = vmatpush1.xpose.msra.mxu0 %v480
        %518 = vmatprep.subr.mxu0 0.0
        %519 = vmatpush1.xpose.msra.mxu0 %v477
        %520 = vmatprep.subr.mxu0 0.0
        %521 = vmatpush2.xpose.msra.mxu0 0.0
        %522 = vmatprep.subr.mxu0 0.0
        %523 = vmatpush2.xpose.msra.mxu0 0.0
        %524 = vmatprep.subr.mxu0 0.0
        %525 = vmatpush2.xpose.msra.mxu0 0.0
        %526 = vmatprep.subr.mxu0 0.0
        %527 = vmatpush2.xpose.msra.mxu0 0.0
        %528 = vmatprep.subr.mxu0 0.0
        %529 = vmatpush2.xpose.msra.mxu0 0.0
        %530 = vmatprep.subr.mxu0 0.0
        %531 = vmatpush2.xpose.msra.mxu0 0.0
        %532 = vmatprep.subr.mxu0 0.0
        %533 = vmatpush2.xpose.msra.mxu0 0.0
        %534 = vmatprep.subr.mxu0 0.0
        %535 = vmatpush2.xpose.msra.mxu0 0.0
        %536 = vmatprep.subr.mxu0 0.0
        %537 = vmatpush2.xpose.msra.mxu0 0.0
        %538 = vmatprep.subr.mxu0 0.0
        %539 = vmatpush2.xpose.msra.mxu0 0.0
        %540 = vmatprep.subr.mxu0 0.0
        %541 = vmatpush2.xpose.msra.mxu0 0.0
        %542 = vmatprep.subr.mxu0 0.0
        %543 = vmatpush2.xpose.msra.mxu0 0.0
        %544 = vmatprep.subr.mxu0 0.0
        %545 = vmatpush2.xpose.msra.mxu0 0.0
        %546 = vmatprep.subr.mxu0 0.0
        %547 = vmatpush2.xpose.msra.mxu0 0.0
        %548 = vmatprep.subr.mxu0 0.0
        %549 = vmatpush2.xpose.msra.mxu0 0.0
        %550 = vmatprep.subr.mxu0 0.0
        %551 = vmatpush2.xpose.msra.mxu0 0.0
        %552 = vmatprep.mubr.f32.mxu0 0.0
        %553 = vmatmul.mubr.f32.gmra.mxu0 %v474
        %v554 = vpop.f32.mrf.mxu0
        %v555 = vadd.f32 %v384, %v554
        %v556 = vpop.f32.mrf.mxu0
        %557 = vdwg.mxu0
        %v558 = vmax.f32 %v470, 0.0
        %v559 = vmax.f32 %v555, 0.0
        %560 = vst.msk [vmem:[%s196] sm:$0xff] %vm228, %v558
        %561 = vst.msk [vmem:[%s196 + $0x8] sm:$0xff] %vm228, %v559
        %s562 = sand.u32 %s103, 1
        %s563 = scalar_lea.sflag [#allocation3], %s562
        %s564 = sand.u32 %s103, 1
        %s565 = smul.addr %s564, 16
        %s566 = scalar_lea.vmem [#allocation2], %s565
        // Predicated region
        $region33: #{tpu_custom_call.1} parent=31 // pred_check
          %p567 = pneg %p113
        $region34: #{tpu_custom_call.1} parent=31 // pred_check_branch
          %569 = sbr.rel (%p567) target = $region36
        $region35: #{tpu_custom_call.1} parent=31 // pred_region
          %s570 = smul.u32 2, %s17
          %s572 = ssub.s32 256, 256
          %573 = vsyncadd %s563, %s572
          %s574 = smul.addr %s570, 128
          %s575 = scalar_lea.hbm %s3, %s574
          %s576 = sshll.u32 %s566, 4
          %s577 = int_to_ptr.vmem [resolvable:$true] %s576
          %582 = dma.vmem_to_hbm [thread:$0]  %s577, 256, %s575, %s563, 128, 128, 8
        $region36: #{tpu_custom_call.1} parent=31 // pred_fallthru
          _
      $region32: #{tpu_custom_call.1} parent=5 // pred_fallthru
        _
      %p583 = scmp.le.s32.totalorder 2, %s12
      // Predicated region
      $region37: #{tpu_custom_call.1} parent=5 // pred_check
        %p584 = pneg %p583
      $region38: #{tpu_custom_call.1} parent=5 // pred_check_branch
        %586 = sbr.rel (%p584) target = $region40
      $region39: #{tpu_custom_call.1} parent=5 // pred_region
        %s587 = ssub.s32 %s12, 2
        // Predicated region
        $region41: #{tpu_custom_call.1} parent=39 // pred_check
          %p588 = pneg %p119
        $region42: #{tpu_custom_call.1} parent=39 // pred_check_branch
          %590 = sbr.rel (%p588) target = $region44
        $region43: #{tpu_custom_call.1} parent=39 // pred_region
          %s591 = sand.u32 %s104, 1
          %s592 = scalar_lea.sflag [#allocation3], %s591
          %s593 = sand.u32 %s104, 1
          %s594 = smul.addr %s593, 16
          %s595 = scalar_lea.vmem [#allocation2], %s594
          %596 = dma.done %s592, 256
        $region44: #{tpu_custom_call.1} parent=39 // pred_fallthru
          _
      $region40: #{tpu_custom_call.1} parent=5 // pred_fallthru
        _
    $region6: #{tpu_custom_call.1} parent=1 // loop_footer
      %s16 = sadd.s32 1, %s12
    $region7: #{tpu_custom_call.1} parent=1 // loop_footer_branch
      %11 = sbr.rel target = $region3
    $region8: #{tpu_custom_call.1} parent=1 // loop_exit
      _
    %597 = vsyncpa [#allocation3], 1
    %s598 = scalar_lea.sflag [#allocation3], 1
    %599 = vsyncpa %s598, 1

</llo_original>
